<compile_context>
chip_gen: v5e
topology: v5e:2x2
jax: 0.10.0
libtpu: 0.0.40
codegen_flags: <defaults>
</compile_context>

<pallas_src>
import functools

import jax
import jax.numpy as jnp
from jax.experimental import pallas as pl
from jax.experimental.pallas import tpu as pltpu

_EPS = 1e-5
_LEAKY_SLOPE = 0.2


def _convblock_kernel(patches_ref, w_ref, o_ref, *, inv_p):
    # patches_ref: (1, K, P)  bf16  -- im2col patches for one batch sample
    # w_ref:       (tc, K)    bf16  -- one tile of output channels
    # o_ref:       (1, tc, P) bf16  -- lane-dense output (last dim = P)
    p = patches_ref[0]                                   # (K, P)
    w = w_ref[...]                                       # (tc, K)

    # Conv as a plain NN (tc,K)@(K,P) MXU matmul: bf16 inputs, f32 accumulate.
    conv = jnp.dot(w, p, preferred_element_type=jnp.float32)   # (tc, P)

    # InstanceNorm2d: exact per-channel stats over the full spatial axis.
    # Centered variance (safer than E[x^2]-mean^2 for large P).
    mean = jnp.sum(conv, axis=-1, keepdims=True) * inv_p        # (tc, 1)
    centered = conv - mean
    var = jnp.sum(centered * centered, axis=-1, keepdims=True) * inv_p
    inv_std = jax.lax.rsqrt(var + _EPS)                         # EUP
    normed = centered * inv_std

    # LeakyReLU(0.2)
    act = jnp.where(normed > 0, normed, _LEAKY_SLOPE * normed)

    o_ref[0] = act.astype(o_ref.dtype)


def _im2col_reflect_kp(x, k=4, stride=2, pad=1):
    """x: (N, C, H, W) -> patches (N, C*k*k, Ho*Wo), reflect padding.

    The K axis is ordered cin-major, tap-minor, which matches the PyTorch
    Conv2d weight flatten weight.reshape(Cout, Cin*k*k).  No transpose of the
    expanded array is needed: taps are stacked directly along a new K axis.
    """
    N, C, H, W = x.shape
    Ho = (H + 2 * pad - k) // stride + 1
    Wo = (W + 2 * pad - k) // stride + 1
    xp = jnp.pad(x, ((0, 0), (0, 0), (pad, pad), (pad, pad)), mode="reflect")
    taps = [xp[:, :, ki:ki + stride * Ho:stride, kj:kj + stride * Wo:stride]
            for ki in range(k) for kj in range(k)]       # each (N, C, Ho, Wo)
    st = jnp.stack(taps, axis=2)                         # (N, C, k*k, Ho, Wo)
    return st.reshape(N, C * k * k, Ho * Wo), Ho, Wo


def _vmem_capacity_bytes():
    """Per-core VMEM capacity (generation-aware); conservative fallback."""
    try:
        return int(pltpu.get_tpu_info().vmem_capacity_bytes)
    except Exception:
        return 64 * 1024 * 1024            # v7x per-core size (smallest)


def _choose_cout_tile(P, K, Cout_pad, out_bytes, budget):
    """Largest Cout tile (multiple of 8, divides Cout_pad) fitting in budget.

    Preferring tc == Cout_pad removes the Cout grid axis entirely so the
    weights are DMA'd exactly once per sample."""
    candidates = sorted({Cout_pad, 512, 256, 128, 64, 32, 16, 8}, reverse=True)
    for tc in candidates:
        if tc > Cout_pad or Cout_pad % tc or tc % 8:
            continue
        step = (2 * K * P * 2              # patches block, bf16, double-buffered
                + 2 * tc * K * 2           # weight block, bf16, double-buffered
                + 2 * tc * P * out_bytes   # output block, double-buffered
                + 3 * tc * P * 4)          # f32 intermediates
        if step <= budget:
            return tc
    return 8


def conv_block(x, weight, out_dtype=jnp.bfloat16):
    """x: (N, Cin, H, W) NCHW; weight: (Cout, Cin, 4, 4) (PyTorch OIHW).

    Returns (N, Cout, H//2, W//2) in `out_dtype` (bf16 by default: the layer
    is memory-bound and the next ConvBlock consumes bf16 anyway)."""
    N, Cin, H, W = x.shape
    Cout = weight.shape[0]
    K = Cin * 16

    patches, Ho, Wo = _im2col_reflect_kp(x)              # (N, K, P)
    P = Ho * Wo
    patches = patches.astype(jnp.bfloat16)               # halve HBM traffic

    # Pad Cout to a sublane multiple (8).  K is NOT padded: the blocks cover
    # the full K axis, which is legal and avoids shipping zero lanes.
    Cout_pad = ((Cout + 7) // 8) * 8
    w2d = weight.reshape(Cout, K)
    w2d = jnp.pad(w2d, ((0, Cout_pad - Cout), (0, 0))).astype(jnp.bfloat16)

    out_bytes = jnp.dtype(out_dtype).itemsize
    vmem_cap = _vmem_capacity_bytes()
    tc = _choose_cout_tile(P, K, Cout_pad, out_bytes,
                           budget=int(0.70 * vmem_cap))
    vmem_limit = int(0.75 * vmem_cap)

    cost = pl.CostEstimate(
        flops=2 * N * P * K * Cout_pad,
        transcendentals=0,
        bytes_accessed=(patches.size * 2 + w2d.size * 2
                        + N * Cout_pad * P * out_bytes))

    kernel = functools.partial(_convblock_kernel, inv_p=1.0 / P)

    out = pl.pallas_call(
        kernel,
        out_shape=jax.ShapeDtypeStruct((N, Cout_pad, P), out_dtype),
        grid_spec=pltpu.PrefetchScalarGridSpec(
            num_scalar_prefetch=0,
            grid=(N, Cout_pad // tc),
            in_specs=[
                pl.BlockSpec((1, K, P), lambda n, c: (n, 0, 0)),
                pl.BlockSpec((tc, K), lambda n, c: (c, 0)),
            ],
            out_specs=pl.BlockSpec((1, tc, P), lambda n, c: (n, c, 0)),
        ),
        compiler_params=pltpu.CompilerParams(
            dimension_semantics=("parallel", "parallel"),
            vmem_limit_bytes=vmem_limit),
        cost_estimate=cost,
    )(patches, w2d)                                      # (N, Cout_pad, P)

    # Lane-dense output: slice channel padding and reshape -- no transpose.
    return out[:, :Cout, :].reshape(N, Cout, Ho, Wo)


def _reference(x, weight):
    """Independent f32 reference using XLA's conv (validates the im2col tap
    ordering / reflect padding against a separate conv implementation)."""
    xf = x.astype(jnp.float32)
    wf = weight.astype(jnp.float32)
    xp = jnp.pad(xf, ((0, 0), (0, 0), (1, 1), (1, 1)), mode="reflect")
    conv = jax.lax.conv_general_dilated(
        xp, wf, window_strides=(2, 2), padding="VALID",
        dimension_numbers=("NCHW", "OIHW", "NCHW"))
    mean = jnp.mean(conv, axis=(2, 3), keepdims=True)
    var = jnp.mean((conv - mean) ** 2, axis=(2, 3), keepdims=True)
    normed = (conv - mean) * jax.lax.rsqrt(var + _EPS)
    return jnp.where(normed > 0, normed, _LEAKY_SLOPE * normed)


if __name__ == "__main__":
    key = jax.random.PRNGKey(0)
    kx, kw = jax.random.split(key)

    N, Cin, H, W = 2, 4, 16, 16
    Cout = 8

    x = jax.random.normal(kx, (N, Cin, H, W), dtype=jnp.float32)
    weight = 0.1 * jax.random.normal(kw, (Cout, Cin, 4, 4), dtype=jnp.float32)

    y = conv_block(x, weight)
    jax.block_until_ready(y)
    assert y.shape == (N, Cout, H // 2, W // 2)

    # bf16 matmul + bf16 output => loose tolerance vs the f32 reference.
    y_ref = _reference(x, weight)
    max_err = float(jnp.max(jnp.abs(y.astype(jnp.float32) - y_ref)))
    assert max_err < 0.1, f"max abs error too large: {max_err}"

    print("KERNEL_OK")
</pallas_src>

<mosaic_0001>
module attributes {stable_mosaic.version = 11 : i64} {
  func.func @_convblock_kernel(%arg0: i32, %arg1: i32, %arg2: memref<1x64x64xbf16, #tpu.memory_space<vmem>>, %arg3: memref<8x64xbf16, #tpu.memory_space<vmem>>, %arg4: memref<1x8x64xbf16, #tpu.memory_space<vmem>>) attributes {dimension_semantics = [#tpu.dimension_semantics<parallel>, #tpu.dimension_semantics<parallel>], iteration_bounds = array<i64: 2, 1>, scalar_prefetch = 0 : i64, scratch_operands = 0 : i64, tpu.core_type = #tpu.core_type<tc>, window_params = [{transform_indices = @transform_0, window_bounds = array<i64: 1, 64, 64>}, {transform_indices = @transform_1, window_bounds = array<i64: 8, 64>}, {transform_indices = @transform_2, window_bounds = array<i64: 1, 8, 64>}]} {
    %c0 = arith.constant 0 : index
    %c0_0 = arith.constant 0 : index
    %c0_1 = arith.constant 0 : index
    %0 = vector.load %arg2[%c0, %c0_0, %c0_1] : memref<1x64x64xbf16, #tpu.memory_space<vmem>>, vector<1x64x64xbf16>
    %1 = vector.shape_cast %0 : vector<1x64x64xbf16> to vector<64x64xbf16>
    %c0_2 = arith.constant 0 : index
    %c0_3 = arith.constant 0 : index
    %2 = vector.load %arg3[%c0_2, %c0_3] : memref<8x64xbf16, #tpu.memory_space<vmem>>, vector<8x64xbf16>
    %cst = arith.constant dense<0.000000e+00> : vector<8x64xf32>
    %3 = tpu.matmul %2, %1, %cst {dimension_numbers = #tpu.dot_dimension_numbers<[1], [0], [0], [1], [0, 0, 1, 1], [], []>} : vector<8x64xbf16>, vector<64x64xbf16>, vector<8x64xf32> -> vector<8x64xf32>
    %cst_4 = arith.constant dense<0.000000e+00> : vector<8xf32>
    %4 = vector.multi_reduction <add>, %3, %cst_4 [1] : vector<8x64xf32> to vector<8xf32>
    %5 = vector.shape_cast %4 : vector<8xf32> to vector<8x1xf32>
    %cst_5 = arith.constant 1.562500e-02 : f32
    %6 = vector.broadcast %cst_5 : f32 to vector<8x1xf32>
    %7 = arith.mulf %5, %6 : vector<8x1xf32>
    %8 = vector.broadcast %7 : vector<8x1xf32> to vector<8x64xf32>
    %9 = arith.subf %3, %8 : vector<8x64xf32>
    %10 = arith.mulf %9, %9 : vector<8x64xf32>
    %cst_6 = arith.constant dense<0.000000e+00> : vector<8xf32>
    %11 = vector.multi_reduction <add>, %10, %cst_6 [1] : vector<8x64xf32> to vector<8xf32>
    %12 = vector.shape_cast %11 : vector<8xf32> to vector<8x1xf32>
    %cst_7 = arith.constant 1.562500e-02 : f32
    %13 = vector.broadcast %cst_7 : f32 to vector<8x1xf32>
    %14 = arith.mulf %12, %13 : vector<8x1xf32>
    %cst_8 = arith.constant 9.99999974E-6 : f32
    %15 = vector.broadcast %cst_8 : f32 to vector<8x1xf32>
    %16 = arith.addf %14, %15 : vector<8x1xf32>
    %17 = math.rsqrt %16 : vector<8x1xf32>
    %18 = vector.broadcast %17 : vector<8x1xf32> to vector<8x64xf32>
    %19 = arith.mulf %9, %18 : vector<8x64xf32>
    %cst_9 = arith.constant 0.000000e+00 : f32
    %20 = vector.broadcast %cst_9 : f32 to vector<8x64xf32>
    %21 = arith.cmpf ogt, %19, %20 : vector<8x64xf32>
    %cst_10 = arith.constant 2.000000e-01 : f32
    %22 = vector.broadcast %cst_10 : f32 to vector<8x64xf32>
    %23 = arith.mulf %22, %19 : vector<8x64xf32>
    %24 = arith.select %21, %19, %23 : vector<8x64xi1>, vector<8x64xf32>
    %25 = arith.truncf %24 : vector<8x64xf32> to vector<8x64xbf16>
    %c0_11 = arith.constant 0 : index
    %c0_12 = arith.constant 0 : index
    %c0_13 = arith.constant 0 : index
    %26 = vector.load %arg4[%c0_11, %c0_12, %c0_13] : memref<1x8x64xbf16, #tpu.memory_space<vmem>>, vector<1x8x64xbf16>
    %27 = vector.shape_cast %26 : vector<1x8x64xbf16> to vector<8x64xbf16>
    %28 = vector.shape_cast %25 : vector<8x64xbf16> to vector<1x8x64xbf16>
    tpu.vector_store %arg4[%c0_11, %c0_12, %c0_13], %28 {strides = array<i32>} : memref<1x8x64xbf16, #tpu.memory_space<vmem>>, vector<1x8x64xbf16>,
    return
  }
  func.func @transform_0(%arg0: i32, %arg1: i32) -> (i32, i32, i32) {
    %c0_i32 = arith.constant 0 : i32
    %c0_i32_0 = arith.constant 0 : i32
    %c0_i32_1 = arith.constant 0 : i32
    return %arg0, %c0_i32, %c0_i32_0 : i32, i32, i32
  }
  func.func @transform_1(%arg0: i32, %arg1: i32) -> (i32, i32) {
    %c0_i32 = arith.constant 0 : i32
    %c0_i32_0 = arith.constant 0 : i32
    return %arg1, %c0_i32 : i32, i32
  }
  func.func @transform_2(%arg0: i32, %arg1: i32) -> (i32, i32, i32) {
    %c0_i32 = arith.constant 0 : i32
    %c0_i32_0 = arith.constant 0 : i32
    return %arg0, %arg1, %c0_i32 : i32, i32, i32
  }
}

</mosaic_0001>

<llo_original>
// kernel: tpu_custom_call.1
$region0: #{tpu_custom_call.1}
  #allocation0 [shape = 'u32[]', space=smem, size = 0x4, offset = 0x4, fixed_abs, tag = 'smem constant byte address 0x4 - core index']
  #allocation1 [shape = 'u32[72,128]{1,0:T(1,128)}', space=vmem, size = 0x9000, scoped, tag = 'internal scratch']
  %s0 = inlined_call_operand.hbm [shape: bf16[2,64,64], index: 0, kind: input, shape index: {}]
  %s1 = inlined_call_operand.hbm [shape: bf16[8,64], index: 1, kind: input, shape index: {}]
  %s2 = inlined_call_operand.hbm [shape: bf16[2,8,64], index: 2, kind: output, shape index: {}]
  %s3 = sld [smem:[#allocation0]]
  $region49: #{tpu_custom_call.1} parent=0
    _
  %s5 = ssub.s32 1, %s3
  %s6 = scalar_select 0, %s5, %s3
  $region1: #{tpu_custom_call.1} parent=0
    #allocation2 [shape = 'u8[32768]{0}', space=vmem, size = 0x8000, scoped, tag = 'input window, operand 0']
    #allocation3 [shape = 's32[2]{0}', space=sflag, size = 0x8, scoped, tag = 'scoped memory for tpu_custom_call.1']
    #allocation4 [shape = 's32[2]{0}', space=sflag, size = 0x8, scoped, tag = 'scoped memory for tpu_custom_call.1']
    #allocation5 [shape = 'u8[2048]{0}', space=vmem, size = 0x800, scoped, tag = 'input window, operand 1, single buffered']
    #allocation6 [shape = 's32[1]{0}', space=sflag, size = 0x4, scoped, tag = 'scoped memory for tpu_custom_call.1']
    #allocation7 [shape = 'u8[4096]{0}', space=vmem, size = 0x1000, scoped, tag = 'output window, operand 0']
    %7 = vsyncpa [#allocation3], 0
    %s8 = scalar_lea.sflag [#allocation3], 1
    %9 = vsyncpa %s8, 0
    %10 = vsyncpa [#allocation6], 0
    %11 = vsyncpa [#allocation4], 0
    %s12 = scalar_lea.sflag [#allocation4], 1
    %13 = vsyncpa %s12, 0
    loop: start=0, step=1, limit=4
    $region2: #{tpu_custom_call.1} parent=1 // loop_pre_header
      _
    $region3: #{tpu_custom_call.1} parent=1 // loop_header
      %s15 = sphi 0, %s19
      %p16 = scmp.ge.s32.totalorder %s15, 4
      %s22 = sphi 0, %s34
      %s23 = sphi 0, %s30
      %s24 = sphi 0, %s22
      %s25 = sphi 0, %s23
      %s26 = sphi 0, %s24
      %s27 = sphi 0, %s25
      %s37 = sphi 0, %s39
      %s40 = sphi 0, %s37
      %s41 = sphi 0, %s40
      %s57 = sphi 0, %s41
      %s63 = sphi 0, %s65
      %s66 = sphi 0, %s63
      %s67 = sphi 0, %s66
      %s83 = sphi 0, %s67
      %s91 = sphi 0, %s93
      %s94 = sphi 0, %s91
      %s95 = sphi 0, %s94
      %s111 = sphi 0, %s95
    $region4: #{tpu_custom_call.1} parent=1 // loop_header_branch
      %18 = sbr.rel (%p16) target = $region8
    $region5: #{tpu_custom_call.1} parent=1 // loop_body
      %s20 = ssub.s32 %s15, 1
      %s21 = ssub.s32 %s15, 2
      %s28 = sadd.s32 1, %s23
      %p29 = scmp.ge.s32.totalorder %s28, 1
      %s30 = scalar_select %p29, 0, %s28
      %s31 = sadd.s32 1, %s22
      %s32 = scalar_select %p29, %s31, %s22
      %p33 = scmp.ge.s32.totalorder %s32, 2
      %s34 = scalar_select %p33, 0, %s32
      %s35 = ssub.s32 %s22, %s34
      %p36 = scmp.eq.s32.totalorder %s35, 0
      %s38 = sadd.s32 %s37, 1
      %s39 = scalar_select %p36, %s37, %s38
      %p42 = pneg %p36
      %p43 = scmp.eq.s32.totalorder %s15, 1
      %p44 = por %p42, %p43
      %p45 = scmp.ne.s32.totalorder %s37, %s40
      %p46 = scmp.eq.s32.totalorder %s15, 0
      %p47 = por %p45, %p46
      %p48 = scmp.ne.s32.totalorder %s37, %s40
      %p49 = scmp.eq.s32.totalorder %s20, 1
      %p50 = por %p48, %p49
      %p51 = scmp.ne.s32.totalorder %s40, %s41
      %p52 = scmp.eq.s32.totalorder %s20, 0
      %p53 = por %p51, %p52
      %p54 = scmp.ne.s32.totalorder %s40, %s41
      %p55 = scmp.eq.s32.totalorder %s21, 1
      %p56 = por %p54, %p55
      %p58 = scmp.ne.s32.totalorder %s41, %s57
      %p59 = scmp.eq.s32.totalorder %s21, 0
      %p60 = por %p58, %p59
      %s61 = ssub.s32 %s23, %s30
      %p62 = scmp.eq.s32.totalorder %s61, 0
      %s64 = sadd.s32 %s63, 1
      %s65 = scalar_select %p62, %s63, %s64
      %p68 = pneg %p62
      %p69 = scmp.eq.s32.totalorder %s15, 1
      %p70 = por %p68, %p69
      %p71 = scmp.ne.s32.totalorder %s63, %s66
      %p72 = scmp.eq.s32.totalorder %s15, 0
      %p73 = por %p71, %p72
      %p74 = scmp.ne.s32.totalorder %s63, %s66
      %p75 = scmp.eq.s32.totalorder %s20, 1
      %p76 = por %p74, %p75
      %p77 = scmp.ne.s32.totalorder %s66, %s67
      %p78 = scmp.eq.s32.totalorder %s20, 0
      %p79 = por %p77, %p78
      %p80 = scmp.ne.s32.totalorder %s66, %s67
      %p81 = scmp.eq.s32.totalorder %s21, 1
      %p82 = por %p80, %p81
      %p84 = scmp.ne.s32.totalorder %s67, %s83
      %p85 = scmp.eq.s32.totalorder %s21, 0
      %p86 = por %p84, %p85
      %s87 = ssub.s32 %s22, %s34
      %s88 = ssub.s32 %s23, %s30
      %s89 = sor.u32 %s87, %s88
      %p90 = scmp.eq.s32.totalorder %s89, 0
      %s92 = sadd.s32 %s91, 1
      %s93 = scalar_select %p90, %s91, %s92
      %p96 = pneg %p90
      %p97 = scmp.eq.s32.totalorder %s15, 1
      %p98 = por %p96, %p97
      %p99 = scmp.ne.s32.totalorder %s91, %s94
      %p100 = scmp.eq.s32.totalorder %s15, 0
      %p101 = por %p99, %p100
      %p102 = scmp.ne.s32.totalorder %s91, %s94
      %p103 = scmp.eq.s32.totalorder %s20, 1
      %p104 = por %p102, %p103
      %p105 = scmp.ne.s32.totalorder %s94, %s95
      %p106 = scmp.eq.s32.totalorder %s20, 0
      %p107 = por %p105, %p106
      %p108 = scmp.ne.s32.totalorder %s94, %s95
      %p109 = scmp.eq.s32.totalorder %s21, 1
      %p110 = por %p108, %p109
      %p112 = scmp.ne.s32.totalorder %s95, %s111
      %p113 = scmp.eq.s32.totalorder %s21, 0
      %p114 = por %p112, %p113
      %p115 = scmp.le.s32.totalorder 1, %s15
      %p116 = scmp.lt.s32.totalorder %s15, 3
      %p117 = pnand %p115, %p116
      %p118 = pneg %p117
      // Predicated region
      $region9: #{tpu_custom_call.1} parent=5 // pred_check
        _
      $region10: #{tpu_custom_call.1} parent=5 // pred_check_branch
        %120 = sbr.rel (%p117) target = $region12
      $region11: #{tpu_custom_call.1} parent=5 // pred_region
        %s121 = ssub.s32 %s15, 1
        // Predicated region
        $region13: #{tpu_custom_call.1} parent=11 // pred_check
          %p122 = pneg %p79
        $region14: #{tpu_custom_call.1} parent=11 // pred_check_branch
          %124 = sbr.rel (%p122) target = $region16
        $region15: #{tpu_custom_call.1} parent=11 // pred_region
          %126 = vsyncadd [#allocation6], 0
          %s127 = smul.addr %s25, 4
          %s128 = scalar_lea.hbm %s1, %s127
          %s130 = sshll.u32 %s128, 4
          %s131 = int_to_ptr.hbm [resolvable:$true] %s130
          %s132 = sshll.u32 [#allocation5], 4
          %s133 = int_to_ptr.vmem [resolvable:$true] %s132
          %135 = dma.hbm_to_vmem [thread:$0]  %s131, 64, %s133, [#allocation6]
        $region16: #{tpu_custom_call.1} parent=11 // pred_fallthru
          _
      $region12: #{tpu_custom_call.1} parent=5 // pred_fallthru
        _
      %p136 = scmp.lt.s32.totalorder %s15, 2
      // Predicated region
      $region17: #{tpu_custom_call.1} parent=5 // pred_check
        %p137 = pneg %p136
      $region18: #{tpu_custom_call.1} parent=5 // pred_check_branch
        %139 = sbr.rel (%p137) target = $region20
      $region19: #{tpu_custom_call.1} parent=5 // pred_region
        // Predicated region
        $region21: #{tpu_custom_call.1} parent=19 // pred_check
          %p140 = pneg %p47
        $region22: #{tpu_custom_call.1} parent=19 // pred_check_branch
          %142 = sbr.rel (%p140) target = $region24
        $region23: #{tpu_custom_call.1} parent=19 // pred_region
          %s143 = sand.u32 %s37, 1
          %s144 = scalar_lea.sflag [#allocation3], %s143
          %s145 = sand.u32 %s37, 1
          %s146 = smul.addr %s145, 32
          %s147 = scalar_lea.vmem [#allocation2], %s146
          %149 = vsyncadd %s144, 0
          %s150 = smul.addr %s22, 8
          %s151 = smul.addr %s150, 4
          %s152 = scalar_lea.hbm %s0, %s151
          %s153 = sshll.u32 %s152, 4
          %s154 = int_to_ptr.hbm [resolvable:$true] %s153
          %s155 = sshll.u32 %s147, 4
          %s156 = int_to_ptr.vmem [resolvable:$true] %s155
          %161 = dma.hbm_to_vmem [thread:$0]  %s154, 512, %s156, %s144, 64, 64, 4
        $region24: #{tpu_custom_call.1} parent=19 // pred_fallthru
          _
      $region20: #{tpu_custom_call.1} parent=5 // pred_fallthru
        _
      %p162 = scmp.le.s32.totalorder 1, %s15
      %p163 = scmp.lt.s32.totalorder %s15, 3
      %p164 = pnand %p162, %p163
      %p165 = pneg %p164
      // Predicated region
      $region25: #{tpu_custom_call.1} parent=5 // pred_check
        _
      $region26: #{tpu_custom_call.1} parent=5 // pred_check_branch
        %167 = sbr.rel (%p164) target = $region28
      $region27: #{tpu_custom_call.1} parent=5 // pred_region
        %s168 = ssub.s32 %s15, 1
        %s169 = sand.u32 %s40, 1
        %s170 = scalar_lea.sflag [#allocation3], %s169
        %s171 = sand.u32 %s40, 1
        %s172 = smul.addr %s171, 32
        %s173 = scalar_lea.vmem [#allocation2], %s172
        // Predicated region
        $region29: #{tpu_custom_call.1} parent=27 // pred_check
          %p174 = pneg %p53
        $region30: #{tpu_custom_call.1} parent=27 // pred_check_branch
          %176 = sbr.rel (%p174) target = $region32
        $region31: #{tpu_custom_call.1} parent=27 // pred_region
          %178 = dma.done %s170, 512
        $region32: #{tpu_custom_call.1} parent=27 // pred_fallthru
          _
        // Predicated region
        $region33: #{tpu_custom_call.1} parent=27 // pred_check
          %p179 = pneg %p79
        $region34: #{tpu_custom_call.1} parent=27 // pred_check_branch
          %181 = sbr.rel (%p179) target = $region36
        $region35: #{tpu_custom_call.1} parent=27 // pred_region
          %183 = dma.done [#allocation6], 64
        $region36: #{tpu_custom_call.1} parent=27 // pred_fallthru
          _
        %s184 = sand.u32 %s40, 1
        %s185 = scalar_lea.sflag [#allocation3], %s184
        %s186 = sand.u32 %s40, 1
        %s187 = smul.addr %s186, 32
        %s188 = scalar_lea.vmem [#allocation2], %s187
        %p189 = pneg %p53
        %p190 = pneg %p50
        %p191 = pneg %p79
        %p192 = pneg %p76
        %p193 = pneg %p107
        %p194 = pneg %p104
        %s195 = sand.u32 %s94, 1
        %s196 = scalar_lea.sflag [#allocation4], %s195
        %s197 = sand.u32 %s94, 1
        %s198 = smul.addr %s197, 4
        %s199 = scalar_lea.vmem [#allocation7], %s198
        %v201 = vld [vmem:[%s173] sm:$0xf]
        %v202 = vld [vmem:[%s173 + $0x4] sm:$0xf]
        %v203 = vld [vmem:[%s173 + $0x8] sm:$0xf]
        %v204 = vld [vmem:[%s173 + $0xc] sm:$0xf]
        %v205 = vld [vmem:[%s173 + $0x10] sm:$0xf]
        %v206 = vld [vmem:[%s173 + $0x14] sm:$0xf]
        %v207 = vld [vmem:[%s173 + $0x18] sm:$0xf]
        %v208 = vld [vmem:[%s173 + $0x1c] sm:$0xf]
        %v209 = vld [vmem:[#allocation5] sm:$0xf]
        %v218 = vunpack.c.l.b16 %v201
        %v219 = vunpack.c.l.b16 %v202
        %v220 = vunpack.c.l.b16 %v203
        %v221 = vunpack.c.l.b16 %v204
        %v222 = vunpack.c.l.b16 %v205
        %v223 = vunpack.c.l.b16 %v206
        %v224 = vunpack.c.l.b16 %v207
        %v225 = vunpack.c.l.b16 %v208
        %v226 = vpack.c.b16 %v219, %v218
        %v227 = vpack.c.b16 %v221, %v220
        %v228 = vpack.c.b16 %v223, %v222
        %v229 = vpack.c.b16 %v225, %v224
        %vm234 = vcmask 523264
        %v236 = vsel %vm234, %v209, 0
        %238 = vmatpush.bf16.msra.mxu0 0
        %239 = vmatpush.bf16.msra.mxu0 0
        %240 = vmatpush.bf16.msra.mxu0 0
        %241 = vmatpush.bf16.msra.mxu0 0
        %242 = vmatpush.bf16.msra.mxu0 %v229
        %243 = vmatpush.bf16.msra.mxu0 %v228
        %244 = vmatpush.bf16.msra.mxu0 %v227
        %245 = vmatpush.bf16.msra.mxu0 %v226
        %246 = vmatmul.bf16.gmra.mxu0 %v236
        %v247 = vpop.f32.mrf.mxu0
        %v248 = vadd.f32 0.0, %v247
        %v249 = vpop.f32.mrf.mxu0
        %250 = vdwg.mxu0
        %v251 = vsel %vm234, %v248, 0.0
        %252 = vadd.xlane.f32.xlu0 %v251
        %v253 = vpop.xlane.xlu0 %252
        %v254 = vmul.f32 %v253, 0.015625
        %v255 = vsub.f32 %v248, %v254
        %v256 = vmul.f32 %v255, %v255
        %v257 = vsel %vm234, %v256, 0.0
        %258 = vadd.xlane.f32.xlu0 %v257
        %v259 = vpop.xlane.xlu0 %258
        %v260 = vmul.f32 %v259, 0.015625
        %v261 = vadd.f32 %v260, 1e-05
        %v262 = vrsqrt.pop %v261
        %v263 = vmul.f32 %v262, %v261
        %v264 = vmul.f32 %v263, %v262
        %v265 = vmul.f32 0.5, %v264
        %v266 = vsub.f32 1.5, %v265
        %v267 = vmul.f32 %v262, %v266
        %vm268 = vweird.f32 %v261
        %vm269 = vweird.f32 %v262
        %vm270 = vmor %vm268, %vm269
        %v271 = vsel %vm270, %v262, %v267
        %v272 = vmul.f32 %v255, %v271
        %vm273 = vcmp.gt.f32.partialorder %v272, 0.0
        %v274 = vmul.f32 %v272, 0.2
        %v275 = vsel %vm273, %v272, %v274
        %v276 = vpack.c.bf16 %v275, %v275
        %vm277 = vcmask 519168
        %278 = vst.msk [vmem:[%s199] sm:$0xf] %vm277, %v276
        %s279 = sand.u32 %s94, 1
        %s280 = scalar_lea.sflag [#allocation4], %s279
        %s281 = sand.u32 %s94, 1
        %s282 = smul.addr %s281, 4
        %s283 = scalar_lea.vmem [#allocation7], %s282
        // Predicated region
        $region37: #{tpu_custom_call.1} parent=27 // pred_check
          %p284 = pneg %p104
        $region38: #{tpu_custom_call.1} parent=27 // pred_check_branch
          %286 = sbr.rel (%p284) target = $region40
        $region39: #{tpu_custom_call.1} parent=27 // pred_region
          %288 = vsyncadd %s280, 0
          %s289 = sadd.s32 %s25, %s24
          %s290 = smul.addr %s289, 4
          %s291 = scalar_lea.hbm %s2, %s290
          %s293 = sshll.u32 %s283, 4
          %s294 = int_to_ptr.vmem [resolvable:$true] %s293
          %s295 = sshll.u32 %s291, 4
          %s296 = int_to_ptr.hbm [resolvable:$true] %s295
          %298 = dma.vmem_to_hbm [thread:$0]  %s294, 64, %s296, %s280
        $region40: #{tpu_custom_call.1} parent=27 // pred_fallthru
          _
      $region28: #{tpu_custom_call.1} parent=5 // pred_fallthru
        _
      %p299 = scmp.le.s32.totalorder 2, %s15
      // Predicated region
      $region41: #{tpu_custom_call.1} parent=5 // pred_check
        %p300 = pneg %p299
      $region42: #{tpu_custom_call.1} parent=5 // pred_check_branch
        %302 = sbr.rel (%p300) target = $region44
      $region43: #{tpu_custom_call.1} parent=5 // pred_region
        %s303 = ssub.s32 %s15, 2
        // Predicated region
        $region45: #{tpu_custom_call.1} parent=43 // pred_check
          %p304 = pneg %p110
        $region46: #{tpu_custom_call.1} parent=43 // pred_check_branch
          %306 = sbr.rel (%p304) target = $region48
        $region47: #{tpu_custom_call.1} parent=43 // pred_region
          %s307 = sand.u32 %s95, 1
          %s308 = scalar_lea.sflag [#allocation4], %s307
          %s309 = sand.u32 %s95, 1
          %s310 = smul.addr %s309, 4
          %s311 = scalar_lea.vmem [#allocation7], %s310
          %313 = dma.done %s308, 64
        $region48: #{tpu_custom_call.1} parent=43 // pred_fallthru
          _
      $region44: #{tpu_custom_call.1} parent=5 // pred_fallthru
        _
    $region6: #{tpu_custom_call.1} parent=1 // loop_footer
      %s19 = sadd.s32 1, %s15
    $region7: #{tpu_custom_call.1} parent=1 // loop_footer_branch
      %14 = sbr.rel target = $region3
    $region8: #{tpu_custom_call.1} parent=1 // loop_exit
      _
    %314 = vsyncpa [#allocation3], 1
    %s315 = scalar_lea.sflag [#allocation3], 1
    %316 = vsyncpa %s315, 1
    %317 = vsyncpa [#allocation6], 1
    %318 = vsyncpa [#allocation4], 1
    %s319 = scalar_lea.sflag [#allocation4], 1
    %320 = vsyncpa %s319, 1

</llo_original>
